<compile_context>
chip_gen: v7x
topology: tpu7x:2x2x1
jax: 0.10.0
libtpu: 0.0.40
codegen_flags: <defaults>
</compile_context>

<pallas_src>
import jax
import jax.numpy as jnp
from jax.experimental import pallas as pl
from jax.experimental.pallas import tpu as pltpu

BN_EPS = 1e-5
EMB = 128  # label-embedding / hidden width, fixed by the module


def _round_up(n, m):
    return ((n + m - 1) // m) * m


# ----------------------------------------------------------------------------
# Kernel
# ----------------------------------------------------------------------------
def _cmm_kernel(x_ref, w1x_ref, y_ref, wle_ref, w1y_ref,
                gamma_ref, beta_ref, w2_ref, b2_ref,
                out_ref, acc_ref):
    k = pl.program_id(0)

    @pl.when(k == 0)
    def _():
        acc_ref[...] = jnp.zeros_like(acc_ref)

    # Dominant work: one (B, TK) x (TK, 128) chunk of  x @ W1x^T  on the MXU.
    # bf16 inputs, f32 accumulation into the resident VMEM scratch.
    acc_ref[...] += jnp.dot(x_ref[...], w1x_ref[...],
                            preferred_element_type=jnp.float32)

    @pl.when(k == pl.num_programs(0) - 1)
    def _():
        # Label-embedding path: (y @ Wle^T) @ W1y^T   (the concat, as a sum).
        # Biases ble/b1 omitted: per-feature constants cancel under
        # training-mode BatchNorm's mean subtraction (exact).
        y_emb = jnp.dot(y_ref[...], wle_ref[...],
                        preferred_element_type=jnp.float32)
        h = acc_ref[...] + jnp.dot(y_emb.astype(w1y_ref.dtype), w1y_ref[...],
                                   preferred_element_type=jnp.float32)

        # BatchNorm1d(128): training-mode batch statistics, biased variance, f32.
        mean = jnp.mean(h, axis=0, keepdims=True)
        cen = h - mean
        var = jnp.mean(cen * cen, axis=0, keepdims=True)
        h = cen * jax.lax.rsqrt(var + BN_EPS)
        h = h * gamma_ref[...] + beta_ref[...]

        # ReLU
        h = jnp.maximum(h, 0.0)

        # Final 128 -> 1 projection as a lane reduce (cheaper than a (128,1) MXU pass).
        out_ref[...] = (jnp.sum(h * w2_ref[...], axis=-1, keepdims=True)
                        + b2_ref[...])


# ----------------------------------------------------------------------------
# One-time parameter preparation (transpose / cast / pad happen here, NOT per call)
# ----------------------------------------------------------------------------
def prepare_params(params, feats_dim, *, max_tk=8192):
    """Convert PyTorch-layout params to kernel layouts once, at load time.

    max_tk: K-tile width.  8192 keeps 2x bf16 (B*TK + TK*128) buffers well
    under v7x's 64 MiB VMEM; on v5e/v6e (128 MiB) it can be ~2x larger.
    """
    num_classes = params["wle"].shape[1]

    tk = min(_round_up(feats_dim, 128), max_tk)
    padded = _round_up(feats_dim, tk)               # zero-pad K so TK divides it

    w1 = params["w1"]                               # (128, feats_dim + 128)
    w1x_t = jnp.zeros((padded, EMB), jnp.bfloat16)
    w1x_t = w1x_t.at[:feats_dim].set(w1[:, :feats_dim].T.astype(jnp.bfloat16))
    w1y_t = w1[:, feats_dim:].T.astype(jnp.bfloat16)          # (128, 128)
    wle_t = params["wle"].T.astype(jnp.bfloat16)               # (num_classes, 128)

    gamma = params["gamma"].reshape(1, EMB).astype(jnp.float32)
    beta = params["beta"].reshape(1, EMB).astype(jnp.float32)
    w2 = params["w2"].reshape(1, EMB).astype(jnp.float32)
    b2 = params["b2"].reshape(1, 1).astype(jnp.float32)

    return dict(wle_t=wle_t, w1x_t=w1x_t, w1y_t=w1y_t,
                gamma=gamma, beta=beta, w2=w2, b2=b2,
                feats_dim=feats_dim, padded_feats=padded, tk=tk,
                num_classes=num_classes)


# ----------------------------------------------------------------------------
# Wrapper
# ----------------------------------------------------------------------------
def cross_modal_matching_head(x, y, prep):
    """x: (B, C, H, W) float32 (NCHW). y: (B, num_classes). prep: prepare_params()."""
    B = x.shape[0]
    x_flat = x.reshape(B, -1)                       # == x.view(B, -1), free reshape
    feats_dim = prep["feats_dim"]
    padded, tk = prep["padded_feats"], prep["tk"]
    nc = prep["num_classes"]
    assert x_flat.shape[1] == feats_dim and y.shape[1] == nc

    xb = x_flat.astype(jnp.bfloat16)                # activation stream in bf16
    if padded != feats_dim:
        xb = jnp.pad(xb, ((0, 0), (0, padded - feats_dim)))
    yb = y.astype(jnp.bfloat16)

    nk = padded // tk

    # Explicit VMEM budget: double-buffered bf16 x/w1x tiles + f32 acc + headroom,
    # clamped so the same kernel fits v7x (64 MiB part) and v5e/v6e.
    tile_bytes = (B * tk + tk * EMB) * 2            # one buffer of each big input
    vmem_limit = int(min(56 * 2**20,
                         max(32 * 2**20, 2 * 2 * tile_bytes + B * EMB * 4 + 8 * 2**20)))

    grid_spec = pltpu.PrefetchScalarGridSpec(
        num_scalar_prefetch=0,
        grid=(nk,),
        in_specs=[
            pl.BlockSpec((B, tk), lambda k: (0, k)),       # x chunk
            pl.BlockSpec((tk, EMB), lambda k: (k, 0)),     # W1x^T chunk
            pl.BlockSpec((B, nc), lambda k: (0, 0)),       # y        (resident)
            pl.BlockSpec((nc, EMB), lambda k: (0, 0)),     # Wle^T    (resident)
            pl.BlockSpec((EMB, EMB), lambda k: (0, 0)),    # W1y^T    (resident)
            pl.BlockSpec((1, EMB), lambda k: (0, 0)),      # gamma
            pl.BlockSpec((1, EMB), lambda k: (0, 0)),      # beta
            pl.BlockSpec((1, EMB), lambda k: (0, 0)),      # w2 row
            pl.BlockSpec((1, 1), lambda k: (0, 0)),        # b2
        ],
        out_specs=pl.BlockSpec((B, 1), lambda k: (0, 0)),
        scratch_shapes=[pltpu.VMEM((B, EMB), jnp.float32)],
    )

    return pl.pallas_call(
        _cmm_kernel,
        out_shape=jax.ShapeDtypeStruct((B, 1), jnp.float32),
        grid_spec=grid_spec,
        compiler_params=pltpu.CompilerParams(
            dimension_semantics=("arbitrary",),            # K is a reduction axis
            vmem_limit_bytes=vmem_limit),
    )(xb, prep["w1x_t"], yb, prep["wle_t"], prep["w1y_t"],
      prep["gamma"], prep["beta"], prep["w2"], prep["b2"])


# ----------------------------------------------------------------------------
# Synthetic init (PyTorch-Linear-style uniform) + pure-JAX reference
# ----------------------------------------------------------------------------
def init_params(key, num_classes, feats_dim):
    ks = jax.random.split(key, 3)

    def lin(k, out_f, in_f):
        bound = 1.0 / jnp.sqrt(in_f)
        kw, kb = jax.random.split(k)
        w = jax.random.uniform(kw, (out_f, in_f), jnp.float32, -bound, bound)
        b = jax.random.uniform(kb, (out_f,), jnp.float32, -bound, bound)
        return w, b

    wle, ble = lin(ks[0], EMB, num_classes)
    w1, b1 = lin(ks[1], EMB, feats_dim + EMB)
    w2, b2 = lin(ks[2], 1, EMB)
    gamma = jnp.ones((EMB,), jnp.float32)           # BatchNorm1d affine init
    beta = jnp.zeros((EMB,), jnp.float32)
    return dict(wle=wle, ble=ble, w1=w1, b1=b1,
                gamma=gamma, beta=beta, w2=w2, b2=b2)


def _reference(x, y, p):
    """Pure-JAX f32 reference of the PyTorch forward (training-mode BN)."""
    B = x.shape[0]
    xf = x.reshape(B, -1)
    ye = y @ p["wle"].T + p["ble"]
    cat = jnp.concatenate([xf, ye], axis=1)
    h = cat @ p["w1"].T + p["b1"]
    mean = jnp.mean(h, axis=0, keepdims=True)
    var = jnp.mean((h - mean) ** 2, axis=0, keepdims=True)
    h = (h - mean) / jnp.sqrt(var + BN_EPS) * p["gamma"] + p["beta"]
    h = jnp.maximum(h, 0.0)
    return h @ p["w2"].T + p["b2"]


if __name__ == "__main__":
    B, C, H, W = 8, 4, 8, 8          # feats_dim = 256
    num_classes = 10
    feats_dim = C * H * W

    key = jax.random.PRNGKey(0)
    kx, ky, kp = jax.random.split(key, 3)
    x = jax.random.normal(kx, (B, C, H, W), jnp.float32)
    logits = jax.random.normal(ky, (B, num_classes), jnp.float32)
    y = jax.nn.softmax(logits, axis=-1)             # soft label vector input

    params = init_params(kp, num_classes, feats_dim)
    prep = prepare_params(params, feats_dim)        # one-time layout conversion

    out = cross_modal_matching_head(x, y, prep)
    out = jax.block_until_ready(out)

    ref = _reference(x, y, params)
    assert out.shape == (B, 1)
    # bf16 streaming of the big matmul -> loose-but-safe tolerance vs f32 reference
    assert jnp.allclose(out, ref, atol=2e-2, rtol=2e-2), (out, ref)
    print("KERNEL_OK")
</pallas_src>

<mosaic_0001>
module attributes {stable_mosaic.version = 11 : i64} {
  func.func @_cmm_kernel(%arg0: i32, %arg1: memref<8x256xbf16, #tpu.memory_space<vmem>>, %arg2: memref<256x128xbf16, #tpu.memory_space<vmem>>, %arg3: memref<8x10xbf16, #tpu.memory_space<vmem>>, %arg4: memref<10x128xbf16, #tpu.memory_space<vmem>>, %arg5: memref<128x128xbf16, #tpu.memory_space<vmem>>, %arg6: memref<1x128xf32, #tpu.memory_space<vmem>>, %arg7: memref<1x128xf32, #tpu.memory_space<vmem>>, %arg8: memref<1x128xf32, #tpu.memory_space<vmem>>, %arg9: memref<1x1xf32, #tpu.memory_space<vmem>>, %arg10: memref<8x1xf32, #tpu.memory_space<vmem>>, %arg11: memref<8x128xf32, #tpu.memory_space<vmem>>) attributes {dimension_semantics = [#tpu.dimension_semantics<arbitrary>], iteration_bounds = array<i64: 1>, scalar_prefetch = 0 : i64, scratch_operands = 1 : i64, tpu.core_type = #tpu.core_type<tc>, window_params = [{transform_indices = @transform_0, window_bounds = array<i64: 8, 256>}, {transform_indices = @transform_1, window_bounds = array<i64: 256, 128>}, {pipeline_mode = #tpu.pipeline_mode<synchronous>, transform_indices = @transform_2, window_bounds = array<i64: 8, 10>}, {pipeline_mode = #tpu.pipeline_mode<synchronous>, transform_indices = @transform_3, window_bounds = array<i64: 10, 128>}, {pipeline_mode = #tpu.pipeline_mode<synchronous>, transform_indices = @transform_4, window_bounds = array<i64: 128, 128>}, {pipeline_mode = #tpu.pipeline_mode<synchronous>, transform_indices = @transform_5, window_bounds = array<i64: 1, 128>}, {pipeline_mode = #tpu.pipeline_mode<synchronous>, transform_indices = @transform_6, window_bounds = array<i64: 1, 128>}, {pipeline_mode = #tpu.pipeline_mode<synchronous>, transform_indices = @transform_7, window_bounds = array<i64: 1, 128>}, {pipeline_mode = #tpu.pipeline_mode<synchronous>, transform_indices = @transform_8, window_bounds = array<i64: 1, 1>}, {pipeline_mode = #tpu.pipeline_mode<synchronous>, transform_indices = @transform_9, window_bounds = array<i64: 8, 1>}]} {
    %c0_i32 = arith.constant 0 : i32
    %0 = arith.cmpi eq, %arg0, %c0_i32 : i32
    %1 = arith.extui %0 : i1 to i32
    %c0_i32_0 = arith.constant 0 : i32
    %2 = arith.cmpi ne, %1, %c0_i32_0 : i32
    scf.if %2 {
      %cst_10 = arith.constant 0.000000e+00 : f32
      %12 = vector.broadcast %cst_10 : f32 to vector<8x128xf32>
      %c0_11 = arith.constant 0 : index
      %c0_12 = arith.constant 0 : index
      %13 = vector.load %arg11[%c0_11, %c0_12] : memref<8x128xf32, #tpu.memory_space<vmem>>, vector<8x128xf32>
      tpu.vector_store %arg11[%c0_11, %c0_12], %12 {strides = array<i32>} : memref<8x128xf32, #tpu.memory_space<vmem>>, vector<8x128xf32>,
    } else {
    }
    %c0 = arith.constant 0 : index
    %c0_1 = arith.constant 0 : index
    %3 = vector.load %arg11[%c0, %c0_1] : memref<8x128xf32, #tpu.memory_space<vmem>>, vector<8x128xf32>
    %c0_2 = arith.constant 0 : index
    %c0_3 = arith.constant 0 : index
    %4 = vector.load %arg1[%c0_2, %c0_3] : memref<8x256xbf16, #tpu.memory_space<vmem>>, vector<8x256xbf16>
    %c0_4 = arith.constant 0 : index
    %c0_5 = arith.constant 0 : index
    %5 = vector.load %arg2[%c0_4, %c0_5] : memref<256x128xbf16, #tpu.memory_space<vmem>>, vector<256x128xbf16>
    %cst = arith.constant dense<0.000000e+00> : vector<8x128xf32>
    %6 = tpu.matmul %4, %5, %cst {dimension_numbers = #tpu.dot_dimension_numbers<[1], [0], [0], [1], [0, 0, 1, 1], [], []>} : vector<8x256xbf16>, vector<256x128xbf16>, vector<8x128xf32> -> vector<8x128xf32>
    %7 = arith.addf %3, %6 : vector<8x128xf32>
    %c0_6 = arith.constant 0 : index
    %c0_7 = arith.constant 0 : index
    %8 = vector.load %arg11[%c0_6, %c0_7] : memref<8x128xf32, #tpu.memory_space<vmem>>, vector<8x128xf32>
    tpu.vector_store %arg11[%c0_6, %c0_7], %7 {strides = array<i32>} : memref<8x128xf32, #tpu.memory_space<vmem>>, vector<8x128xf32>,
    %c0_i32_8 = arith.constant 0 : i32
    %9 = arith.cmpi eq, %arg0, %c0_i32_8 : i32
    %10 = arith.extui %9 : i1 to i32
    %c0_i32_9 = arith.constant 0 : i32
    %11 = arith.cmpi ne, %10, %c0_i32_9 : i32
    scf.if %11 {
      %c0_10 = arith.constant 0 : index
      %c0_11 = arith.constant 0 : index
      %12 = vector.load %arg3[%c0_10, %c0_11] : memref<8x10xbf16, #tpu.memory_space<vmem>>, vector<8x10xbf16>
      %c0_12 = arith.constant 0 : index
      %c0_13 = arith.constant 0 : index
      %13 = vector.load %arg4[%c0_12, %c0_13] : memref<10x128xbf16, #tpu.memory_space<vmem>>, vector<10x128xbf16>
      %cst_14 = arith.constant dense<0.000000e+00> : vector<8x128xf32>
      %14 = tpu.matmul %12, %13, %cst_14 {dimension_numbers = #tpu.dot_dimension_numbers<[1], [0], [0], [1], [0, 0, 1, 1], [], []>} : vector<8x10xbf16>, vector<10x128xbf16>, vector<8x128xf32> -> vector<8x128xf32>
      %c0_15 = arith.constant 0 : index
      %c0_16 = arith.constant 0 : index
      %15 = vector.load %arg11[%c0_15, %c0_16] : memref<8x128xf32, #tpu.memory_space<vmem>>, vector<8x128xf32>
      %16 = arith.truncf %14 : vector<8x128xf32> to vector<8x128xbf16>
      %c0_17 = arith.constant 0 : index
      %c0_18 = arith.constant 0 : index
      %17 = vector.load %arg5[%c0_17, %c0_18] : memref<128x128xbf16, #tpu.memory_space<vmem>>, vector<128x128xbf16>
      %cst_19 = arith.constant dense<0.000000e+00> : vector<8x128xf32>
      %18 = tpu.matmul %16, %17, %cst_19 {dimension_numbers = #tpu.dot_dimension_numbers<[1], [0], [0], [1], [0, 0, 1, 1], [], []>} : vector<8x128xbf16>, vector<128x128xbf16>, vector<8x128xf32> -> vector<8x128xf32>
      %19 = arith.addf %15, %18 : vector<8x128xf32>
      %cst_20 = arith.constant dense<0.000000e+00> : vector<128xf32>
      %20 = vector.multi_reduction <add>, %19, %cst_20 [0] : vector<8x128xf32> to vector<128xf32>
      %21 = vector.shape_cast %20 : vector<128xf32> to vector<1x128xf32>
      %cst_21 = arith.constant 8.000000e+00 : f32
      %22 = vector.broadcast %cst_21 : f32 to vector<1x128xf32>
      %23 = arith.divf %21, %22 : vector<1x128xf32>
      %24 = vector.broadcast %23 : vector<1x128xf32> to vector<8x128xf32>
      %25 = arith.subf %19, %24 : vector<8x128xf32>
      %26 = arith.mulf %25, %25 : vector<8x128xf32>
      %cst_22 = arith.constant dense<0.000000e+00> : vector<128xf32>
      %27 = vector.multi_reduction <add>, %26, %cst_22 [0] : vector<8x128xf32> to vector<128xf32>
      %28 = vector.shape_cast %27 : vector<128xf32> to vector<1x128xf32>
      %cst_23 = arith.constant 8.000000e+00 : f32
      %29 = vector.broadcast %cst_23 : f32 to vector<1x128xf32>
      %30 = arith.divf %28, %29 : vector<1x128xf32>
      %cst_24 = arith.constant 9.99999974E-6 : f32
      %31 = vector.broadcast %cst_24 : f32 to vector<1x128xf32>
      %32 = arith.addf %30, %31 : vector<1x128xf32>
      %33 = math.rsqrt %32 : vector<1x128xf32>
      %34 = vector.broadcast %33 : vector<1x128xf32> to vector<8x128xf32>
      %35 = arith.mulf %25, %34 : vector<8x128xf32>
      %c0_25 = arith.constant 0 : index
      %c0_26 = arith.constant 0 : index
      %36 = vector.load %arg6[%c0_25, %c0_26] : memref<1x128xf32, #tpu.memory_space<vmem>>, vector<1x128xf32>
      %37 = vector.broadcast %36 : vector<1x128xf32> to vector<8x128xf32>
      %38 = arith.mulf %35, %37 : vector<8x128xf32>
      %c0_27 = arith.constant 0 : index
      %c0_28 = arith.constant 0 : index
      %39 = vector.load %arg7[%c0_27, %c0_28] : memref<1x128xf32, #tpu.memory_space<vmem>>, vector<1x128xf32>
      %40 = vector.broadcast %39 : vector<1x128xf32> to vector<8x128xf32>
      %41 = arith.addf %38, %40 : vector<8x128xf32>
      %cst_29 = arith.constant 0.000000e+00 : f32
      %42 = vector.broadcast %cst_29 : f32 to vector<8x128xf32>
      %43 = arith.maximumf %41, %42 : vector<8x128xf32>
      %c0_30 = arith.constant 0 : index
      %c0_31 = arith.constant 0 : index
      %44 = vector.load %arg8[%c0_30, %c0_31] : memref<1x128xf32, #tpu.memory_space<vmem>>, vector<1x128xf32>
      %45 = vector.broadcast %44 : vector<1x128xf32> to vector<8x128xf32>
      %46 = arith.mulf %43, %45 : vector<8x128xf32>
      %cst_32 = arith.constant dense<0.000000e+00> : vector<8xf32>
      %47 = vector.multi_reduction <add>, %46, %cst_32 [1] : vector<8x128xf32> to vector<8xf32>
      %48 = vector.shape_cast %47 : vector<8xf32> to vector<8x1xf32>
      %c0_33 = arith.constant 0 : index
      %c0_34 = arith.constant 0 : index
      %49 = vector.load %arg9[%c0_33, %c0_34] : memref<1x1xf32, #tpu.memory_space<vmem>>, vector<1x1xf32>
      %50 = vector.broadcast %49 : vector<1x1xf32> to vector<8x1xf32>
      %51 = arith.addf %48, %50 : vector<8x1xf32>
      %c0_35 = arith.constant 0 : index
      %c0_36 = arith.constant 0 : index
      %52 = vector.load %arg10[%c0_35, %c0_36] : memref<8x1xf32, #tpu.memory_space<vmem>>, vector<8x1xf32>
      tpu.vector_store %arg10[%c0_35, %c0_36], %51 {strides = array<i32>} : memref<8x1xf32, #tpu.memory_space<vmem>>, vector<8x1xf32>,
    } else {
    }
    return
  }
  func.func @transform_0(%arg0: i32) -> (i32, i32) {
    %c0_i32 = arith.constant 0 : i32
    %c0_i32_0 = arith.constant 0 : i32
    return %c0_i32, %arg0 : i32, i32
  }
  func.func @transform_1(%arg0: i32) -> (i32, i32) {
    %c0_i32 = arith.constant 0 : i32
    %c0_i32_0 = arith.constant 0 : i32
    return %arg0, %c0_i32 : i32, i32
  }
  func.func @transform_2(%arg0: i32) -> (i32, i32) {
    %c0_i32 = arith.constant 0 : i32
    %c0_i32_0 = arith.constant 0 : i32
    %c0_i32_1 = arith.constant 0 : i32
    return %c0_i32, %c0_i32_0 : i32, i32
  }
  func.func @transform_3(%arg0: i32) -> (i32, i32) {
    %c0_i32 = arith.constant 0 : i32
    %c0_i32_0 = arith.constant 0 : i32
    %c0_i32_1 = arith.constant 0 : i32
    return %c0_i32, %c0_i32_0 : i32, i32
  }
  func.func @transform_4(%arg0: i32) -> (i32, i32) {
    %c0_i32 = arith.constant 0 : i32
    %c0_i32_0 = arith.constant 0 : i32
    %c0_i32_1 = arith.constant 0 : i32
    return %c0_i32, %c0_i32_0 : i32, i32
  }
  func.func @transform_5(%arg0: i32) -> (i32, i32) {
    %c0_i32 = arith.constant 0 : i32
    %c0_i32_0 = arith.constant 0 : i32
    %c0_i32_1 = arith.constant 0 : i32
    return %c0_i32, %c0_i32_0 : i32, i32
  }
  func.func @transform_6(%arg0: i32) -> (i32, i32) {
    %c0_i32 = arith.constant 0 : i32
    %c0_i32_0 = arith.constant 0 : i32
    %c0_i32_1 = arith.constant 0 : i32
    return %c0_i32, %c0_i32_0 : i32, i32
  }
  func.func @transform_7(%arg0: i32) -> (i32, i32) {
    %c0_i32 = arith.constant 0 : i32
    %c0_i32_0 = arith.constant 0 : i32
    %c0_i32_1 = arith.constant 0 : i32
    return %c0_i32, %c0_i32_0 : i32, i32
  }
  func.func @transform_8(%arg0: i32) -> (i32, i32) {
    %c0_i32 = arith.constant 0 : i32
    %c0_i32_0 = arith.constant 0 : i32
    %c0_i32_1 = arith.constant 0 : i32
    return %c0_i32, %c0_i32_0 : i32, i32
  }
  func.func @transform_9(%arg0: i32) -> (i32, i32) {
    %c0_i32 = arith.constant 0 : i32
    %c0_i32_0 = arith.constant 0 : i32
    %c0_i32_1 = arith.constant 0 : i32
    return %c0_i32, %c0_i32_0 : i32, i32
  }
}

</mosaic_0001>

<llo_original>
// kernel: tpu_custom_call.1
$region0: #{tpu_custom_call.1}
  #allocation0 [shape = 'u32[]', space=smem, size = 0x4, offset = 0x4, fixed_abs, tag = 'smem constant byte address 0x4 - core index']
  #allocation1 [shape = 'u32[144,128]{1,0:T(1,128)}', space=vmem, size = 0x12000, scoped, tag = 'internal scratch']
  #allocation2 [shape = 'f32[8,128]{1,0:T(8,128)}', space=vmem, size = 0x1000, scoped, tag = 'scratch operand']
  #allocation3 [shape = 'f32[1,1]{1,0:T(1,128)S(1)}', space=vmem, size = 0x200, scoped, tag = 'scoped memory for tpu_custom_call.1']
  %s0 = inlined_call_operand.hbm [shape: bf16[8,256], index: 0, kind: input, shape index: {}]
  %s1 = inlined_call_operand.hbm [shape: bf16[256,128], index: 1, kind: input, shape index: {}]
  %s2 = inlined_call_operand.vmem [shape: bf16[8,10], index: 2, kind: input, shape index: {}]
  %s3 = inlined_call_operand.vmem [shape: bf16[10,128], index: 3, kind: input, shape index: {}]
  %s4 = inlined_call_operand.hbm [shape: bf16[128,128], index: 4, kind: input, shape index: {}]
  %s5 = inlined_call_operand.vmem [shape: f32[1,128], index: 5, kind: input, shape index: {}]
  %s6 = inlined_call_operand.vmem [shape: f32[1,128], index: 6, kind: input, shape index: {}]
  %s7 = inlined_call_operand.vmem [shape: f32[1,128], index: 7, kind: input, shape index: {}]
  %s8 = inlined_call_operand.<no memory space> [shape: f32[1,1], index: 8, kind: input, shape index: {}]
  %s9 = inlined_call_operand.vmem [shape: f32[8,1], index: 9, kind: output, shape index: {}]
  %s10 = sld [smem:[#allocation0]]
  $region66: #{tpu_custom_call.1} parent=0
    _
  %s12 = ssub.s32 1, %s10
  %s13 = scalar_select 0, %s12, %s10
  %v14 = vstv %s8
  %15 = vst [vmem:[#allocation3] sm:$0x1] %v14
  $region1: #{tpu_custom_call.1} parent=0
    #allocation4 [shape = 'u8[4096]{0}', space=vmem, size = 0x1000, scoped, tag = 'input window, operand 0, single buffered']
    #allocation5 [shape = 's32[1]{0}', space=sflag, size = 0x4, scoped, tag = 'scoped memory for tpu_custom_call.1']
    #allocation6 [shape = 'u8[65536]{0}', space=vmem, size = 0x10000, scoped, tag = 'input window, operand 1, single buffered']
    #allocation7 [shape = 's32[1]{0}', space=sflag, size = 0x4, scoped, tag = 'scoped memory for tpu_custom_call.1']
    #allocation8 [shape = 'u8[32768]{0}', space=vmem, size = 0x8000, scoped, tag = 'input window, operand 4, single buffered']
    %16 = vsyncpa [#allocation5], 0
    %17 = vsyncpa [#allocation7], 0
    // Predicated region
    $region2: #{tpu_custom_call.1} parent=1 // pred_check
      _
    $region3: #{tpu_custom_call.1} parent=1 // pred_check_branch
      %19 = sbr.rel (0) target = $region5
    $region4: #{tpu_custom_call.1} parent=1 // pred_region
      %s21 = ssub.s32 128, 128
      %22 = vsyncadd [#allocation5], %s21
      %s24 = sshll.u32 [#allocation4], 4
      %s25 = int_to_ptr.vmem [resolvable:$true] %s24
      %27 = dma.hbm_to_vmem [thread:$0]  %s0, 128, %s25, [#allocation5]
    $region5: #{tpu_custom_call.1} parent=1 // pred_fallthru
      _
    // Predicated region
    $region6: #{tpu_custom_call.1} parent=1 // pred_check
      _
    $region7: #{tpu_custom_call.1} parent=1 // pred_check_branch
      %29 = sbr.rel (0) target = $region9
    $region8: #{tpu_custom_call.1} parent=1 // pred_region
      %s31 = ssub.s32 2048, 2048
      %32 = vsyncadd [#allocation7], %s31
      %s33 = sshll.u32 [#allocation6], 4
      %s34 = int_to_ptr.vmem [resolvable:$true] %s33
      %39 = dma.hbm_to_vmem [thread:$0]  %s1, 2048, %s34, [#allocation7], 64, 64, 4
    $region9: #{tpu_custom_call.1} parent=1 // pred_fallthru
      _
    // Predicated region
    $region10: #{tpu_custom_call.1} parent=1 // pred_check
      _
    $region11: #{tpu_custom_call.1} parent=1 // pred_check_branch
      %41 = sbr.rel (0) target = $region13
    $region12: #{tpu_custom_call.1} parent=1 // pred_region
      _
    $region13: #{tpu_custom_call.1} parent=1 // pred_fallthru
      _
    // Predicated region
    $region14: #{tpu_custom_call.1} parent=1 // pred_check
      _
    $region15: #{tpu_custom_call.1} parent=1 // pred_check_branch
      %43 = sbr.rel (0) target = $region17
    $region16: #{tpu_custom_call.1} parent=1 // pred_region
      _
    $region17: #{tpu_custom_call.1} parent=1 // pred_fallthru
      _
    // Predicated region
    $region18: #{tpu_custom_call.1} parent=1 // pred_check
      _
    $region19: #{tpu_custom_call.1} parent=1 // pred_check_branch
      %45 = sbr.rel (0) target = $region21
    $region20: #{tpu_custom_call.1} parent=1 // pred_region
      %s47 = ssub.s32 1024, 1024
      %48 = vsyncadd [#allocation7], %s47
      %s49 = sshll.u32 [#allocation8], 4
      %s50 = int_to_ptr.vmem [resolvable:$true] %s49
      %55 = dma.hbm_to_vmem [thread:$0]  %s4, 1024, %s50, [#allocation7], 64, 64, 4
    $region21: #{tpu_custom_call.1} parent=1 // pred_fallthru
      _
    // Predicated region
    $region22: #{tpu_custom_call.1} parent=1 // pred_check
      _
    $region23: #{tpu_custom_call.1} parent=1 // pred_check_branch
      %57 = sbr.rel (0) target = $region25
    $region24: #{tpu_custom_call.1} parent=1 // pred_region
      _
    $region25: #{tpu_custom_call.1} parent=1 // pred_fallthru
      _
    // Predicated region
    $region26: #{tpu_custom_call.1} parent=1 // pred_check
      _
    $region27: #{tpu_custom_call.1} parent=1 // pred_check_branch
      %59 = sbr.rel (0) target = $region29
    $region28: #{tpu_custom_call.1} parent=1 // pred_region
      _
    $region29: #{tpu_custom_call.1} parent=1 // pred_fallthru
      _
    // Predicated region
    $region30: #{tpu_custom_call.1} parent=1 // pred_check
      _
    $region31: #{tpu_custom_call.1} parent=1 // pred_check_branch
      %61 = sbr.rel (0) target = $region33
    $region32: #{tpu_custom_call.1} parent=1 // pred_region
      _
    $region33: #{tpu_custom_call.1} parent=1 // pred_fallthru
      _
    // Predicated region
    $region34: #{tpu_custom_call.1} parent=1 // pred_check
      _
    $region35: #{tpu_custom_call.1} parent=1 // pred_check_branch
      %63 = sbr.rel (0) target = $region37
    $region36: #{tpu_custom_call.1} parent=1 // pred_region
      _
    $region37: #{tpu_custom_call.1} parent=1 // pred_fallthru
      _
    // Predicated region
    $region38: #{tpu_custom_call.1} parent=1 // pred_check
      _
    $region39: #{tpu_custom_call.1} parent=1 // pred_check_branch
      %65 = sbr.rel (0) target = $region41
    $region40: #{tpu_custom_call.1} parent=1 // pred_region
      %66 = dma.done [#allocation5], 128
    $region41: #{tpu_custom_call.1} parent=1 // pred_fallthru
      _
    // Predicated region
    $region42: #{tpu_custom_call.1} parent=1 // pred_check
      _
    $region43: #{tpu_custom_call.1} parent=1 // pred_check_branch
      %68 = sbr.rel (0) target = $region45
    $region44: #{tpu_custom_call.1} parent=1 // pred_region
      %69 = dma.done [#allocation7], 2048
    $region45: #{tpu_custom_call.1} parent=1 // pred_fallthru
      _
    // Predicated region
    $region46: #{tpu_custom_call.1} parent=1 // pred_check
      _
    $region47: #{tpu_custom_call.1} parent=1 // pred_check_branch
      %71 = sbr.rel (0) target = $region49
    $region48: #{tpu_custom_call.1} parent=1 // pred_region
      %72 = dma.done [#allocation7], 1024
    $region49: #{tpu_custom_call.1} parent=1 // pred_fallthru
      _
    %p74 = scmp.eq.s32.totalorder 0, 0
    // Predicated region
    $region50: #{tpu_custom_call.1} parent=1 // pred_check
      %p75 = pneg %p74
    $region51: #{tpu_custom_call.1} parent=1 // pred_check_branch
      %77 = sbr.rel (%p75) target = $region53
    $region52: #{tpu_custom_call.1} parent=1 // pred_region
      %78 = vst [vmem:[#allocation2] sm:$0xff] 0.0
    $region53: #{tpu_custom_call.1} parent=1 // pred_fallthru
      _
    %v79 = vld [vmem:[#allocation2] sm:$0xff]
    %v80 = vld [vmem:[#allocation4] sm:$0xff]
    %v81 = vld [vmem:[#allocation6] sm:$0xf]
    %v82 = vld [vmem:[#allocation6 + $0x4] sm:$0xf]
    %v83 = vld [vmem:[#allocation6 + $0x8] sm:$0xf]
    %v84 = vld [vmem:[#allocation6 + $0xc] sm:$0xf]
    %v85 = vld [vmem:[#allocation6 + $0x10] sm:$0xf]
    %v86 = vld [vmem:[#allocation6 + $0x14] sm:$0xf]
    %v87 = vld [vmem:[#allocation6 + $0x18] sm:$0xf]
    %v88 = vld [vmem:[#allocation6 + $0x1c] sm:$0xf]
    %v89 = vld [vmem:[#allocation6 + $0x20] sm:$0xf]
    %v90 = vld [vmem:[#allocation6 + $0x24] sm:$0xf]
    %v91 = vld [vmem:[#allocation6 + $0x28] sm:$0xf]
    %v92 = vld [vmem:[#allocation6 + $0x2c] sm:$0xf]
    %v93 = vld [vmem:[#allocation6 + $0x30] sm:$0xf]
    %v94 = vld [vmem:[#allocation6 + $0x34] sm:$0xf]
    %v95 = vld [vmem:[#allocation6 + $0x38] sm:$0xf]
    %v96 = vld [vmem:[#allocation6 + $0x3c] sm:$0xf]
    %v97 = vld [vmem:[#allocation6 + $0x40] sm:$0xf]
    %v98 = vld [vmem:[#allocation6 + $0x44] sm:$0xf]
    %v99 = vld [vmem:[#allocation6 + $0x48] sm:$0xf]
    %v100 = vld [vmem:[#allocation6 + $0x4c] sm:$0xf]
    %v101 = vld [vmem:[#allocation6 + $0x50] sm:$0xf]
    %v102 = vld [vmem:[#allocation6 + $0x54] sm:$0xf]
    %v103 = vld [vmem:[#allocation6 + $0x58] sm:$0xf]
    %v104 = vld [vmem:[#allocation6 + $0x5c] sm:$0xf]
    %v105 = vld [vmem:[#allocation6 + $0x60] sm:$0xf]
    %v106 = vld [vmem:[#allocation6 + $0x64] sm:$0xf]
    %v107 = vld [vmem:[#allocation6 + $0x68] sm:$0xf]
    %v108 = vld [vmem:[#allocation6 + $0x6c] sm:$0xf]
    %v109 = vld [vmem:[#allocation6 + $0x70] sm:$0xf]
    %v110 = vld [vmem:[#allocation6 + $0x74] sm:$0xf]
    %v111 = vld [vmem:[#allocation6 + $0x78] sm:$0xf]
    %v112 = vld [vmem:[#allocation6 + $0x7c] sm:$0xf]
    %v114 = vunpack.c.l.b16 %v80
    %v115 = vunpack.c.h.b16 %v80
    %v116 = vpack.c.b16 %v114, %v114
    %v117 = vpack.c.b16 %v115, %v115
    %v152 = vunpack.c.l.b16 %v81
    %v153 = vunpack.c.l.b16 %v82
    %v154 = vunpack.c.l.b16 %v83
    %v155 = vunpack.c.l.b16 %v84
    %v156 = vunpack.c.l.b16 %v85
    %v157 = vunpack.c.l.b16 %v86
    %v158 = vunpack.c.l.b16 %v87
    %v159 = vunpack.c.l.b16 %v88
    %v160 = vunpack.c.l.b16 %v89
    %v161 = vunpack.c.l.b16 %v90
    %v162 = vunpack.c.l.b16 %v91
    %v163 = vunpack.c.l.b16 %v92
    %v164 = vunpack.c.l.b16 %v93
    %v165 = vunpack.c.l.b16 %v94
    %v166 = vunpack.c.l.b16 %v95
    %v167 = vunpack.c.l.b16 %v96
    %v168 = vunpack.c.l.b16 %v97
    %v169 = vunpack.c.l.b16 %v98
    %v170 = vunpack.c.l.b16 %v99
    %v171 = vunpack.c.l.b16 %v100
    %v172 = vunpack.c.l.b16 %v101
    %v173 = vunpack.c.l.b16 %v102
    %v174 = vunpack.c.l.b16 %v103
    %v175 = vunpack.c.l.b16 %v104
    %v176 = vunpack.c.l.b16 %v105
    %v177 = vunpack.c.l.b16 %v106
    %v178 = vunpack.c.l.b16 %v107
    %v179 = vunpack.c.l.b16 %v108
    %v180 = vunpack.c.l.b16 %v109
    %v181 = vunpack.c.l.b16 %v110
    %v182 = vunpack.c.l.b16 %v111
    %v183 = vunpack.c.l.b16 %v112
    %v184 = vpack.c.b16 %v153, %v152
    %v185 = vpack.c.b16 %v155, %v154
    %v186 = vpack.c.b16 %v157, %v156
    %v187 = vpack.c.b16 %v159, %v158
    %v188 = vpack.c.b16 %v161, %v160
    %v189 = vpack.c.b16 %v163, %v162
    %v190 = vpack.c.b16 %v165, %v164
    %v191 = vpack.c.b16 %v167, %v166
    %v192 = vpack.c.b16 %v169, %v168
    %v193 = vpack.c.b16 %v171, %v170
    %v194 = vpack.c.b16 %v173, %v172
    %v195 = vpack.c.b16 %v175, %v174
    %v196 = vpack.c.b16 %v177, %v176
    %v197 = vpack.c.b16 %v179, %v178
    %v198 = vpack.c.b16 %v181, %v180
    %v199 = vpack.c.b16 %v183, %v182
    %216 = vmatprep.subr.bf16.mxu0 0
    %217 = vmatpush1.bf16.msra.mxu0 %v184
    %218 = vmatprep.subr.bf16.mxu0 0
    %219 = vmatpush1.bf16.msra.mxu0 %v185
    %220 = vmatprep.subr.bf16.mxu0 0
    %221 = vmatpush1.bf16.msra.mxu0 %v186
    %222 = vmatprep.subr.bf16.mxu0 0
    %223 = vmatpush1.bf16.msra.mxu0 %v187
    %224 = vmatprep.subr.bf16.mxu0 0
    %225 = vmatpush1.bf16.msra.mxu0 %v188
    %226 = vmatprep.subr.bf16.mxu0 0
    %227 = vmatpush1.bf16.msra.mxu0 %v189
    %228 = vmatprep.subr.bf16.mxu0 0
    %229 = vmatpush1.bf16.msra.mxu0 %v190
    %230 = vmatprep.subr.bf16.mxu0 0
    %231 = vmatpush1.bf16.msra.mxu0 %v191
    %232 = vmatprep.subr.bf16.mxu0 0
    %233 = vmatpush1.bf16.msra.mxu0 %v192
    %234 = vmatprep.subr.bf16.mxu0 0
    %235 = vmatpush1.bf16.msra.mxu0 %v193
    %236 = vmatprep.subr.bf16.mxu0 0
    %237 = vmatpush1.bf16.msra.mxu0 %v194
    %238 = vmatprep.subr.bf16.mxu0 0
    %239 = vmatpush1.bf16.msra.mxu0 %v195
    %240 = vmatprep.subr.bf16.mxu0 0
    %241 = vmatpush1.bf16.msra.mxu0 %v196
    %242 = vmatprep.subr.bf16.mxu0 0
    %243 = vmatpush1.bf16.msra.mxu0 %v197
    %244 = vmatprep.subr.bf16.mxu0 0
    %245 = vmatpush1.bf16.msra.mxu0 %v198
    %246 = vmatprep.subr.bf16.mxu0 0
    %247 = vmatpush1.bf16.msra.mxu0 %v199
    %248 = vmatprep.mubr.bf16.mxu0 %v117
    %249 = vmatmul.mubr.bf16.gmra.mrb[0].mxu0 %v116
    %v250 = vpop.f32.mrb[0].mxu0
    %v251 = vadd.f32 0.0, %v250
    %v252 = vpop.f32.mrb[0].mxu0
    %v253 = vpop.f32.mrb[0].mxu0
    %v254 = vpop.f32.mrb[0].mxu0
    %255 = vdwg.mxu0
    %v256 = vadd.f32 %v79, %v251
    %257 = vst [vmem:[#allocation2] sm:$0xff] %v256
    // Predicated region
    $region54: #{tpu_custom_call.1} parent=1 // pred_check
      %p258 = pneg %p74
    $region55: #{tpu_custom_call.1} parent=1 // pred_check_branch
      %260 = sbr.rel (%p258) target = $region57
    $region56: #{tpu_custom_call.1} parent=1 // pred_region
      %v261 = vld [vmem:[%s2] sm:$0xf]
      %v262 = vld [vmem:[%s3] sm:$0xf]
      %v263 = vld [vmem:[%s3 + $0x4] sm:$0x1]
      %v266 = vunpack.c.l.b16 %v262
      %v267 = vunpack.c.l.b16 %v263
      %v268 = vpack.c.b16 %v267, %v266
      %vm269 = vcmask 80896
      %v271 = vsel %vm269, %v261, 0
      %vm273 = vcmask 1044480
      %v275 = vsel %vm273, %v268, 0
      %277 = vmatprep.subr.bf16.mxu0 0
      %278 = vmatpush1.bf16.msra.mxu0 %v275
      %279 = vmatprep.subr.bf16.mxu0 0
      %280 = vmatpush1.bf16.msra.mxu0 0
      %281 = vmatprep.subr.bf16.mxu0 0
      %282 = vmatpush1.bf16.msra.mxu0 0
      %283 = vmatprep.subr.bf16.mxu0 0
      %284 = vmatpush1.bf16.msra.mxu0 0
      %285 = vmatprep.subr.bf16.mxu0 0
      %286 = vmatpush1.bf16.msra.mxu0 0
      %287 = vmatprep.subr.bf16.mxu0 0
      %288 = vmatpush1.bf16.msra.mxu0 0
      %289 = vmatprep.subr.bf16.mxu0 0
      %290 = vmatpush1.bf16.msra.mxu0 0
      %291 = vmatprep.subr.bf16.mxu0 0
      %292 = vmatpush1.bf16.msra.mxu0 0
      %293 = vmatprep.subr.bf16.mxu0 0
      %294 = vmatpush1.bf16.msra.mxu0 0
      %295 = vmatprep.subr.bf16.mxu0 0
      %296 = vmatpush1.bf16.msra.mxu0 0
      %297 = vmatprep.subr.bf16.mxu0 0
      %298 = vmatpush1.bf16.msra.mxu0 0
      %299 = vmatprep.subr.bf16.mxu0 0
      %300 = vmatpush1.bf16.msra.mxu0 0
      %301 = vmatprep.subr.bf16.mxu0 0
      %302 = vmatpush1.bf16.msra.mxu0 0
      %303 = vmatprep.subr.bf16.mxu0 0
      %304 = vmatpush1.bf16.msra.mxu0 0
      %305 = vmatprep.subr.bf16.mxu0 0
      %306 = vmatpush1.bf16.msra.mxu0 0
      %307 = vmatprep.subr.bf16.mxu0 0
      %308 = vmatpush1.bf16.msra.mxu0 0
      %309 = vmatprep.mubr.bf16.mxu0 0
      %310 = vmatmul.mubr.bf16.gmra.mrb[0].mxu0 %v271
      %v311 = vpop.f32.mrb[0].mxu0
      %v312 = vadd.f32 0.0, %v311
      %v313 = vpop.f32.mrb[0].mxu0
      %v314 = vpop.f32.mrb[0].mxu0
      %v315 = vpop.f32.mrb[0].mxu0
      %316 = vdwg.mxu0
      %v317 = vld [vmem:[#allocation2] sm:$0xff]
      %v318 = vpack.c.bf16 %v312, %v312
      %v319 = vld [vmem:[#allocation8] sm:$0xf]
      %v320 = vld [vmem:[#allocation8 + $0x4] sm:$0xf]
      %v321 = vld [vmem:[#allocation8 + $0x8] sm:$0xf]
      %v322 = vld [vmem:[#allocation8 + $0xc] sm:$0xf]
      %v323 = vld [vmem:[#allocation8 + $0x10] sm:$0xf]
      %v324 = vld [vmem:[#allocation8 + $0x14] sm:$0xf]
      %v325 = vld [vmem:[#allocation8 + $0x18] sm:$0xf]
      %v326 = vld [vmem:[#allocation8 + $0x1c] sm:$0xf]
      %v327 = vld [vmem:[#allocation8 + $0x20] sm:$0xf]
      %v328 = vld [vmem:[#allocation8 + $0x24] sm:$0xf]
      %v329 = vld [vmem:[#allocation8 + $0x28] sm:$0xf]
      %v330 = vld [vmem:[#allocation8 + $0x2c] sm:$0xf]
      %v331 = vld [vmem:[#allocation8 + $0x30] sm:$0xf]
      %v332 = vld [vmem:[#allocation8 + $0x34] sm:$0xf]
      %v333 = vld [vmem:[#allocation8 + $0x38] sm:$0xf]
      %v334 = vld [vmem:[#allocation8 + $0x3c] sm:$0xf]
      %v351 = vunpack.c.l.b16 %v319
      %v352 = vunpack.c.l.b16 %v320
      %v353 = vunpack.c.l.b16 %v321
      %v354 = vunpack.c.l.b16 %v322
      %v355 = vunpack.c.l.b16 %v323
      %v356 = vunpack.c.l.b16 %v324
      %v357 = vunpack.c.l.b16 %v325
      %v358 = vunpack.c.l.b16 %v326
      %v359 = vunpack.c.l.b16 %v327
      %v360 = vunpack.c.l.b16 %v328
      %v361 = vunpack.c.l.b16 %v329
      %v362 = vunpack.c.l.b16 %v330
      %v363 = vunpack.c.l.b16 %v331
      %v364 = vunpack.c.l.b16 %v332
      %v365 = vunpack.c.l.b16 %v333
      %v366 = vunpack.c.l.b16 %v334
      %v367 = vpack.c.b16 %v352, %v351
      %v368 = vpack.c.b16 %v354, %v353
      %v369 = vpack.c.b16 %v356, %v355
      %v370 = vpack.c.b16 %v358, %v357
      %v371 = vpack.c.b16 %v360, %v359
      %v372 = vpack.c.b16 %v362, %v361
      %v373 = vpack.c.b16 %v364, %v363
      %v374 = vpack.c.b16 %v366, %v365
      %383 = vmatprep.subr.bf16.mxu0 0
      %384 = vmatpush1.bf16.msra.mxu0 %v367
      %385 = vmatprep.subr.bf16.mxu0 0
      %386 = vmatpush1.bf16.msra.mxu0 %v368
      %387 = vmatprep.subr.bf16.mxu0 0
      %388 = vmatpush1.bf16.msra.mxu0 %v369
      %389 = vmatprep.subr.bf16.mxu0 0
      %390 = vmatpush1.bf16.msra.mxu0 %v370
      %391 = vmatprep.subr.bf16.mxu0 0
      %392 = vmatpush1.bf16.msra.mxu0 %v371
      %393 = vmatprep.subr.bf16.mxu0 0
      %394 = vmatpush1.bf16.msra.mxu0 %v372
      %395 = vmatprep.subr.bf16.mxu0 0
      %396 = vmatpush1.bf16.msra.mxu0 %v373
      %397 = vmatprep.subr.bf16.mxu0 0
      %398 = vmatpush1.bf16.msra.mxu0 %v374
      %399 = vmatprep.subr.bf16.mxu0 0
      %400 = vmatpush1.bf16.msra.mxu0 0
      %401 = vmatprep.subr.bf16.mxu0 0
      %402 = vmatpush1.bf16.msra.mxu0 0
      %403 = vmatprep.subr.bf16.mxu0 0
      %404 = vmatpush1.bf16.msra.mxu0 0
      %405 = vmatprep.subr.bf16.mxu0 0
      %406 = vmatpush1.bf16.msra.mxu0 0
      %407 = vmatprep.subr.bf16.mxu0 0
      %408 = vmatpush1.bf16.msra.mxu0 0
      %409 = vmatprep.subr.bf16.mxu0 0
      %410 = vmatpush1.bf16.msra.mxu0 0
      %411 = vmatprep.subr.bf16.mxu0 0
      %412 = vmatpush1.bf16.msra.mxu0 0
      %413 = vmatprep.subr.bf16.mxu0 0
      %414 = vmatpush1.bf16.msra.mxu0 0
      %415 = vmatprep.mubr.bf16.mxu0 0
      %416 = vmatmul.mubr.bf16.gmra.mrb[0].mxu0 %v318
      %v417 = vpop.f32.mrb[0].mxu0
      %v418 = vadd.f32 0.0, %v417
      %v419 = vpop.f32.mrb[0].mxu0
      %v420 = vpop.f32.mrb[0].mxu0
      %v421 = vpop.f32.mrb[0].mxu0
      %422 = vdwg.mxu0
      %v423 = vadd.f32 %v317, %v418
      %v424 = vrot.slane %v423, 4
      %v425 = vadd.f32 %v423, %v424
      %v426 = vrot.slane %v425, 2
      %v427 = vadd.f32 %v425, %v426
      %v428 = vrot.slane %v427, 1
      %v429 = vadd.f32 %v427, %v428
      %v430 = vrcp.pop 8.0
      %v431 = vmul.f32 %v429, %v430
      %v432 = vsub.f32 %v423, %v431
      %v433 = vmul.f32 %v432, %v432
      %v434 = vrot.slane %v433, 4
      %v435 = vadd.f32 %v433, %v434
      %v436 = vrot.slane %v435, 2
      %v437 = vadd.f32 %v435, %v436
      %v438 = vrot.slane %v437, 1
      %v439 = vadd.f32 %v437, %v438
      %v440 = vmul.f32 %v439, %v430
      %v441 = vadd.f32 %v440, 1e-05
      %v442 = vrsqrt.pop %v441
      %v443 = vmul.f32 %v432, %v442
      %v444 = vld [vmem:[%s5] sm:$0x1]
      %v446 = vlaneseq
      %v447 = vshrl.u32 %v446, 7
      %v448 = vsub.s32 0, %v447
      %v449 = vrot.slane %v444, %v448
      %v451 = vmul.f32 %v443, %v449
      %v452 = vld [vmem:[%s6] sm:$0x1]
      %v454 = vlaneseq
      %v455 = vshrl.u32 %v454, 7
      %v456 = vsub.s32 0, %v455
      %v457 = vrot.slane %v452, %v456
      %v459 = vadd.f32 %v451, %v457
      %v460 = vmax.f32 %v459, 0.0
      %v461 = vld [vmem:[%s7] sm:$0x1]
      %v463 = vlaneseq
      %v464 = vshrl.u32 %v463, 7
      %v465 = vsub.s32 0, %v464
      %v466 = vrot.slane %v461, %v465
      %v468 = vmul.f32 %v460, %v466
      %469 = vadd.xlane.f32.xlu0 %v468
      %v470 = vpop.xlane.xlu0 %469
      %v471 = vld [vmem:[#allocation3] sm:$0x1]
      %v473 = vlaneseq
      %v474 = vshrl.u32 %v473, 7
      %v475 = vsub.s32 0, %v474
      %v476 = vrot.slane %v471, %v475
      %v478 = vadd.f32 %v470, %v476
      %vm479 = vcmask 7168
      %480 = vst.msk [vmem:[%s9] sm:$0xff] %vm479, %v478
    $region57: #{tpu_custom_call.1} parent=1 // pred_fallthru
      _
    // Predicated region
    $region58: #{tpu_custom_call.1} parent=1 // pred_check
      _
    $region59: #{tpu_custom_call.1} parent=1 // pred_check_branch
      %482 = sbr.rel (0) target = $region61
    $region60: #{tpu_custom_call.1} parent=1 // pred_region
      _
    $region61: #{tpu_custom_call.1} parent=1 // pred_fallthru
      _
    // Predicated region
    $region62: #{tpu_custom_call.1} parent=1 // pred_check
      _
    $region63: #{tpu_custom_call.1} parent=1 // pred_check_branch
      %484 = sbr.rel (0) target = $region65
    $region64: #{tpu_custom_call.1} parent=1 // pred_region
      _
    $region65: #{tpu_custom_call.1} parent=1 // pred_fallthru
      _
    %485 = vsyncpa [#allocation5], 1
    %486 = vsyncpa [#allocation7], 1

</llo_original>
